<compile_context>
chip_gen: v6e
topology: v6e:2x2x1
jax: 0.10.0
libtpu: 0.0.40
codegen_flags: <defaults>
</compile_context>

<pallas_src>
import jax
import jax.numpy as jnp
from jax.experimental import pallas as pl
from jax.experimental.pallas import tpu as pltpu


def _make_msa_kernel(n_scales):
    """Kernel factory so the (static) number of scales can be unrolled."""

    def kernel(x_ref, w_ref, b_ref, o_ref):
        # x_ref: (1, C, THW)   w_ref: (S, C, 1)   b_ref: (S, 1, 1)   o_ref: (1, C, THW)
        x = x_ref[0]                                           # (C, THW) f32
        att = None
        for s in range(n_scales):                              # unrolled, S is tiny
            # per-pixel 1x1 conv for scale s: VPU broadcast-mul + sublane reduce
            z = jnp.sum(x * w_ref[s], axis=0, keepdims=True) + b_ref[s]   # (1, THW)
            a = jax.nn.sigmoid(z)                              # EUP
            att = a if att is None else att + a
        # broadcast attention over channels (sublanes) and scale x
        o_ref[0] = (x * att).astype(o_ref.dtype)

    return kernel


def _choose_spatial_tile(hw, c, bytes_budget=4 * 1024 * 1024):
    """Pick a lane-dense HW tile: 2 in + 2 out double-buffered f32 blocks
    of shape (C, THW) must stay under `bytes_budget` (safe on v5e/v6e/v7x)."""
    per_lane_bytes = 4 * c * 4                    # (in+out) x double-buffer x C x f32
    max_thw = max(128, (bytes_budget // per_lane_bytes) // 128 * 128)
    if hw <= max_thw:
        return hw                                 # full extent (always a legal block)
    thw = max_thw
    while thw >= 128:                             # prefer a tile that divides HW evenly
        if hw % thw == 0:
            return thw
        thw -= 128
    return max_thw


def multi_scale_attention(x_nchw, weights, biases):
    """x_nchw: (B, C, H, W) f32.
    weights: (S, C) -- one 1x1-conv weight vector per scale (Conv2d weight (1,C,1,1) squeezed).
    biases:  (S,)   -- one bias per scale.
    Returns (B, C, H, W)."""
    B, C, H, W = x_nchw.shape
    S = weights.shape[0]
    HW = H * W

    # NCHW -> (B, C, HW) is a pure view of contiguous memory: no transpose pass.
    x_flat = x_nchw.reshape(B, C, HW).astype(jnp.float32)
    w = weights.reshape(S, C, 1).astype(jnp.float32)
    b = biases.reshape(S, 1, 1).astype(jnp.float32)

    thw = _choose_spatial_tile(HW, C)
    grid = (B, pl.cdiv(HW, thw))

    cost = pl.CostEstimate(
        flops=B * HW * (2 * S * C + 2 * S + C),
        transcendentals=B * HW * S,
        bytes_accessed=2 * B * C * HW * 4 + S * C * 4 + S * 4,
    )

    out_flat = pl.pallas_call(
        _make_msa_kernel(S),
        out_shape=jax.ShapeDtypeStruct((B, C, HW), jnp.float32),
        grid_spec=pltpu.PrefetchScalarGridSpec(
            num_scalar_prefetch=0,
            grid=grid,
            in_specs=[
                pl.BlockSpec((1, C, thw), lambda bi, ti: (bi, 0, ti)),  # spatial tile of x
                pl.BlockSpec((S, C, 1), lambda bi, ti: (0, 0, 0)),      # shared conv weights
                pl.BlockSpec((S, 1, 1), lambda bi, ti: (0, 0, 0)),      # shared conv biases
            ],
            out_specs=pl.BlockSpec((1, C, thw), lambda bi, ti: (bi, 0, ti)),
        ),
        compiler_params=pltpu.CompilerParams(
            dimension_semantics=("parallel", "parallel"),
        ),
        cost_estimate=cost,
    )(x_flat, w, b)

    # (B, C, HW) -> (B, C, H, W): free view again.
    return out_flat.reshape(B, C, H, W)


def _reference(x_nchw, weights, biases):
    # plain-JAX reference of the PyTorch forward (NCHW)
    att_sum = 0.0
    for s in range(weights.shape[0]):
        # 1x1 conv with a single output channel
        amap = jnp.einsum("bchw,c->bhw", x_nchw, weights[s]) + biases[s]     # (B,H,W)
        amap = amap[:, None, :, :]                                           # (B,1,H,W)
        amap = jax.nn.sigmoid(jnp.mean(amap, axis=1, keepdims=True))         # mean over 1 chan = no-op
        att_sum = att_sum + amap
    return att_sum * x_nchw


if __name__ == "__main__":
    key = jax.random.PRNGKey(0)
    k_x, k_w, k_b = jax.random.split(key, 3)

    B, C, H, W = 2, 4, 16, 16
    scales = [1, 2]
    S = len(scales)

    # deterministic synthetic parameters (Conv2d(in_channels, 1, 1) -> weight (1,C,1,1), bias (1,))
    x = jax.random.normal(k_x, (B, C, H, W), dtype=jnp.float32)
    weights = jax.random.normal(k_w, (S, C), dtype=jnp.float32) * 0.5   # per-scale 1x1 conv weights
    biases = jax.random.normal(k_b, (S,), dtype=jnp.float32) * 0.1      # per-scale biases

    out = multi_scale_attention(x, weights, biases)
    out = jax.block_until_ready(out)

    ref = _reference(x, weights, biases)
    assert out.shape == (B, C, H, W)
    assert jnp.allclose(out, ref, atol=1e-5, rtol=1e-5), "mismatch vs reference"

    print("KERNEL_OK")
</pallas_src>

<mosaic_0001>
module attributes {stable_mosaic.version = 11 : i64} {
  func.func @kernel(%arg0: i32, %arg1: i32, %arg2: memref<1x4x256xf32, #tpu.memory_space<vmem>>, %arg3: memref<2x4x1xf32, #tpu.memory_space<vmem>>, %arg4: memref<2x1x1xf32, #tpu.memory_space<vmem>>, %arg5: memref<1x4x256xf32, #tpu.memory_space<vmem>>) attributes {dimension_semantics = [#tpu.dimension_semantics<parallel>, #tpu.dimension_semantics<parallel>], iteration_bounds = array<i64: 2, 1>, scalar_prefetch = 0 : i64, scratch_operands = 0 : i64, tpu.core_type = #tpu.core_type<tc>, window_params = [{transform_indices = @transform_0, window_bounds = array<i64: 1, 4, 256>}, {pipeline_mode = #tpu.pipeline_mode<synchronous>, transform_indices = @transform_1, window_bounds = array<i64: 2, 4, 1>}, {pipeline_mode = #tpu.pipeline_mode<synchronous>, transform_indices = @transform_2, window_bounds = array<i64: 2, 1, 1>}, {transform_indices = @transform_3, window_bounds = array<i64: 1, 4, 256>}]} {
    %c0 = arith.constant 0 : index
    %c0_0 = arith.constant 0 : index
    %c0_1 = arith.constant 0 : index
    %0 = vector.load %arg2[%c0, %c0_0, %c0_1] : memref<1x4x256xf32, #tpu.memory_space<vmem>>, vector<1x4x256xf32>
    %1 = vector.shape_cast %0 : vector<1x4x256xf32> to vector<4x256xf32>
    %c0_2 = arith.constant 0 : index
    %c0_3 = arith.constant 0 : index
    %c0_4 = arith.constant 0 : index
    %2 = vector.load %arg3[%c0_2, %c0_3, %c0_4] : memref<2x4x1xf32, #tpu.memory_space<vmem>>, vector<1x4x1xf32>
    %3 = vector.shape_cast %2 : vector<1x4x1xf32> to vector<4x1xf32>
    %4 = vector.broadcast %3 : vector<4x1xf32> to vector<4x256xf32>
    %5 = arith.mulf %1, %4 : vector<4x256xf32>
    %cst = arith.constant dense<0.000000e+00> : vector<256xf32>
    %6 = vector.multi_reduction <add>, %5, %cst [0] : vector<4x256xf32> to vector<256xf32>
    %7 = vector.shape_cast %6 : vector<256xf32> to vector<1x256xf32>
    %c0_5 = arith.constant 0 : index
    %c0_6 = arith.constant 0 : index
    %c0_7 = arith.constant 0 : index
    %8 = vector.load %arg4[%c0_5, %c0_6, %c0_7] : memref<2x1x1xf32, #tpu.memory_space<vmem>>, vector<1x1x1xf32>
    %9 = vector.shape_cast %8 : vector<1x1x1xf32> to vector<1x1xf32>
    %10 = vector.broadcast %9 : vector<1x1xf32> to vector<1x256xf32>
    %11 = arith.addf %7, %10 : vector<1x256xf32>
    %12 = arith.negf %11 : vector<1x256xf32>
    %13 = math.exp %12 : vector<1x256xf32>
    %cst_8 = arith.constant 1.000000e+00 : f32
    %14 = vector.broadcast %cst_8 : f32 to vector<1x256xf32>
    %15 = arith.addf %14, %13 : vector<1x256xf32>
    %16 = arith.divf %14, %15 : vector<1x256xf32>
    %c1 = arith.constant 1 : index
    %c0_9 = arith.constant 0 : index
    %c0_10 = arith.constant 0 : index
    %17 = vector.load %arg3[%c1, %c0_9, %c0_10] : memref<2x4x1xf32, #tpu.memory_space<vmem>>, vector<1x4x1xf32>
    %18 = vector.shape_cast %17 : vector<1x4x1xf32> to vector<4x1xf32>
    %19 = vector.broadcast %18 : vector<4x1xf32> to vector<4x256xf32>
    %20 = arith.mulf %1, %19 : vector<4x256xf32>
    %cst_11 = arith.constant dense<0.000000e+00> : vector<256xf32>
    %21 = vector.multi_reduction <add>, %20, %cst_11 [0] : vector<4x256xf32> to vector<256xf32>
    %22 = vector.shape_cast %21 : vector<256xf32> to vector<1x256xf32>
    %c1_12 = arith.constant 1 : index
    %c0_13 = arith.constant 0 : index
    %c0_14 = arith.constant 0 : index
    %23 = vector.load %arg4[%c1_12, %c0_13, %c0_14] : memref<2x1x1xf32, #tpu.memory_space<vmem>>, vector<1x1x1xf32>
    %24 = vector.shape_cast %23 : vector<1x1x1xf32> to vector<1x1xf32>
    %25 = vector.broadcast %24 : vector<1x1xf32> to vector<1x256xf32>
    %26 = arith.addf %22, %25 : vector<1x256xf32>
    %27 = arith.negf %26 : vector<1x256xf32>
    %28 = math.exp %27 : vector<1x256xf32>
    %cst_15 = arith.constant 1.000000e+00 : f32
    %29 = vector.broadcast %cst_15 : f32 to vector<1x256xf32>
    %30 = arith.addf %29, %28 : vector<1x256xf32>
    %31 = arith.divf %29, %30 : vector<1x256xf32>
    %32 = arith.addf %16, %31 : vector<1x256xf32>
    %33 = vector.broadcast %32 : vector<1x256xf32> to vector<4x256xf32>
    %34 = arith.mulf %1, %33 : vector<4x256xf32>
    %c0_16 = arith.constant 0 : index
    %c0_17 = arith.constant 0 : index
    %c0_18 = arith.constant 0 : index
    %35 = vector.load %arg5[%c0_16, %c0_17, %c0_18] : memref<1x4x256xf32, #tpu.memory_space<vmem>>, vector<1x4x256xf32>
    %36 = vector.shape_cast %35 : vector<1x4x256xf32> to vector<4x256xf32>
    %37 = vector.shape_cast %34 : vector<4x256xf32> to vector<1x4x256xf32>
    tpu.vector_store %arg5[%c0_16, %c0_17, %c0_18], %37 {strides = array<i32>} : memref<1x4x256xf32, #tpu.memory_space<vmem>>, vector<1x4x256xf32>,
    return
  }
  func.func @transform_0(%arg0: i32, %arg1: i32) -> (i32, i32, i32) {
    %c0_i32 = arith.constant 0 : i32
    %c0_i32_0 = arith.constant 0 : i32
    return %arg0, %c0_i32, %arg1 : i32, i32, i32
  }
  func.func @transform_1(%arg0: i32, %arg1: i32) -> (i32, i32, i32) {
    %c0_i32 = arith.constant 0 : i32
    %c0_i32_0 = arith.constant 0 : i32
    %c0_i32_1 = arith.constant 0 : i32
    %c0_i32_2 = arith.constant 0 : i32
    return %c0_i32, %c0_i32_0, %c0_i32_1 : i32, i32, i32
  }
  func.func @transform_2(%arg0: i32, %arg1: i32) -> (i32, i32, i32) {
    %c0_i32 = arith.constant 0 : i32
    %c0_i32_0 = arith.constant 0 : i32
    %c0_i32_1 = arith.constant 0 : i32
    %c0_i32_2 = arith.constant 0 : i32
    return %c0_i32, %c0_i32_0, %c0_i32_1 : i32, i32, i32
  }
  func.func @transform_3(%arg0: i32, %arg1: i32) -> (i32, i32, i32) {
    %c0_i32 = arith.constant 0 : i32
    %c0_i32_0 = arith.constant 0 : i32
    return %arg0, %c0_i32, %arg1 : i32, i32, i32
  }
}

</mosaic_0001>

<llo_original>
// kernel: tpu_custom_call.1
$region0: #{tpu_custom_call.1}
  #allocation0 [shape = 'u32[]', space=smem, size = 0x4, offset = 0x4, fixed_abs, tag = 'smem constant byte address 0x4 - core index']
  #allocation1 [shape = 'u32[144,128]{1,0:T(1,128)}', space=vmem, size = 0x12000, scoped, tag = 'internal scratch']
  %s0 = inlined_call_operand.hbm [shape: f32[2,4,256], index: 0, kind: input, shape index: {}]
  %s1 = inlined_call_operand.vmem [shape: f32[2,4,1], index: 1, kind: input, shape index: {}]
  %s2 = inlined_call_operand.vmem [shape: f32[2,1,1], index: 2, kind: input, shape index: {}]
  %s3 = inlined_call_operand.hbm [shape: f32[2,4,256], index: 3, kind: output, shape index: {}]
  %s4 = sld [smem:[#allocation0]]
  $region49: #{tpu_custom_call.1} parent=0
    _
  %s6 = ssub.s32 1, %s4
  %s7 = scalar_select 0, %s6, %s4
  $region1: #{tpu_custom_call.1} parent=0
    #allocation2 [shape = 'u8[8192]{0}', space=vmem, size = 0x2000, scoped, tag = 'input window, operand 0']
    #allocation3 [shape = 's32[2]{0}', space=sflag, size = 0x8, scoped, tag = 'scoped memory for tpu_custom_call.1']
    #allocation4 [shape = 's32[2]{0}', space=sflag, size = 0x8, scoped, tag = 'scoped memory for tpu_custom_call.1']
    #allocation5 [shape = 'u8[8192]{0}', space=vmem, size = 0x2000, scoped, tag = 'output window, operand 0']
    %8 = vsyncpa [#allocation3], 0
    %s9 = scalar_lea.sflag [#allocation3], 1
    %10 = vsyncpa %s9, 0
    %11 = vsyncpa [#allocation4], 0
    %s12 = scalar_lea.sflag [#allocation4], 1
    %13 = vsyncpa %s12, 0
    loop: start=0, step=1, limit=4
    $region2: #{tpu_custom_call.1} parent=1 // loop_pre_header
      _
    $region3: #{tpu_custom_call.1} parent=1 // loop_header
      %s15 = sphi 0, %s19
      %p16 = scmp.ge.s32.totalorder %s15, 4
      %s22 = sphi 0, %s34
      %s23 = sphi 0, %s30
      %s24 = sphi 0, %s22
      %s25 = sphi 0, %s23
      %s26 = sphi 0, %s24
      %s27 = sphi 0, %s25
      %s39 = sphi 0, %s41
      %s42 = sphi 0, %s39
      %s43 = sphi 0, %s42
      %s59 = sphi 0, %s43
      %s63 = sphi 0, %s63
      %s65 = sphi 0, %s63
      %s66 = sphi 0, %s65
      %s80 = sphi 0, %s66
      %s84 = sphi 0, %s84
      %s86 = sphi 0, %s84
      %s87 = sphi 0, %s86
      %s101 = sphi 0, %s87
      %s109 = sphi 0, %s111
      %s112 = sphi 0, %s109
      %s113 = sphi 0, %s112
      %s129 = sphi 0, %s113
    $region4: #{tpu_custom_call.1} parent=1 // loop_header_branch
      %18 = sbr.rel (%p16) target = $region8
    $region5: #{tpu_custom_call.1} parent=1 // loop_body
      %s20 = ssub.s32 %s15, 1
      %s21 = ssub.s32 %s15, 2
      %s28 = sadd.s32 1, %s23
      %p29 = scmp.ge.s32.totalorder %s28, 1
      %s30 = scalar_select %p29, 0, %s28
      %s31 = sadd.s32 1, %s22
      %s32 = scalar_select %p29, %s31, %s22
      %p33 = scmp.ge.s32.totalorder %s32, 2
      %s34 = scalar_select %p33, 0, %s32
      %s35 = ssub.s32 %s22, %s34
      %s36 = ssub.s32 %s23, %s30
      %s37 = sor.u32 %s35, %s36
      %p38 = scmp.eq.s32.totalorder %s37, 0
      %s40 = sadd.s32 %s39, 1
      %s41 = scalar_select %p38, %s39, %s40
      %p44 = pneg %p38
      %p45 = scmp.eq.s32.totalorder %s15, 1
      %p46 = por %p44, %p45
      %p47 = scmp.ne.s32.totalorder %s39, %s42
      %p48 = scmp.eq.s32.totalorder %s15, 0
      %p49 = por %p47, %p48
      %p50 = scmp.ne.s32.totalorder %s39, %s42
      %p51 = scmp.eq.s32.totalorder %s20, 1
      %p52 = por %p50, %p51
      %p53 = scmp.ne.s32.totalorder %s42, %s43
      %p54 = scmp.eq.s32.totalorder %s20, 0
      %p55 = por %p53, %p54
      %p56 = scmp.ne.s32.totalorder %s42, %s43
      %p57 = scmp.eq.s32.totalorder %s21, 1
      %p58 = por %p56, %p57
      %p60 = scmp.ne.s32.totalorder %s43, %s59
      %p61 = scmp.eq.s32.totalorder %s21, 0
      %p62 = por %p60, %p61
      %s64 = sadd.s32 %s63, 1
      %p67 = scmp.eq.s32.totalorder %s15, 1
      %p68 = scmp.ne.s32.totalorder %s63, %s65
      %p69 = scmp.eq.s32.totalorder %s15, 0
      %p70 = por %p68, %p69
      %p71 = scmp.ne.s32.totalorder %s63, %s65
      %p72 = scmp.eq.s32.totalorder %s20, 1
      %p73 = por %p71, %p72
      %p74 = scmp.ne.s32.totalorder %s65, %s66
      %p75 = scmp.eq.s32.totalorder %s20, 0
      %p76 = por %p74, %p75
      %p77 = scmp.ne.s32.totalorder %s65, %s66
      %p78 = scmp.eq.s32.totalorder %s21, 1
      %p79 = por %p77, %p78
      %p81 = scmp.ne.s32.totalorder %s66, %s80
      %p82 = scmp.eq.s32.totalorder %s21, 0
      %p83 = por %p81, %p82
      %s85 = sadd.s32 %s84, 1
      %p88 = scmp.eq.s32.totalorder %s15, 1
      %p89 = scmp.ne.s32.totalorder %s84, %s86
      %p90 = scmp.eq.s32.totalorder %s15, 0
      %p91 = por %p89, %p90
      %p92 = scmp.ne.s32.totalorder %s84, %s86
      %p93 = scmp.eq.s32.totalorder %s20, 1
      %p94 = por %p92, %p93
      %p95 = scmp.ne.s32.totalorder %s86, %s87
      %p96 = scmp.eq.s32.totalorder %s20, 0
      %p97 = por %p95, %p96
      %p98 = scmp.ne.s32.totalorder %s86, %s87
      %p99 = scmp.eq.s32.totalorder %s21, 1
      %p100 = por %p98, %p99
      %p102 = scmp.ne.s32.totalorder %s87, %s101
      %p103 = scmp.eq.s32.totalorder %s21, 0
      %p104 = por %p102, %p103
      %s105 = ssub.s32 %s22, %s34
      %s106 = ssub.s32 %s23, %s30
      %s107 = sor.u32 %s105, %s106
      %p108 = scmp.eq.s32.totalorder %s107, 0
      %s110 = sadd.s32 %s109, 1
      %s111 = scalar_select %p108, %s109, %s110
      %p114 = pneg %p108
      %p115 = scmp.eq.s32.totalorder %s15, 1
      %p116 = por %p114, %p115
      %p117 = scmp.ne.s32.totalorder %s109, %s112
      %p118 = scmp.eq.s32.totalorder %s15, 0
      %p119 = por %p117, %p118
      %p120 = scmp.ne.s32.totalorder %s109, %s112
      %p121 = scmp.eq.s32.totalorder %s20, 1
      %p122 = por %p120, %p121
      %p123 = scmp.ne.s32.totalorder %s112, %s113
      %p124 = scmp.eq.s32.totalorder %s20, 0
      %p125 = por %p123, %p124
      %p126 = scmp.ne.s32.totalorder %s112, %s113
      %p127 = scmp.eq.s32.totalorder %s21, 1
      %p128 = por %p126, %p127
      %p130 = scmp.ne.s32.totalorder %s113, %s129
      %p131 = scmp.eq.s32.totalorder %s21, 0
      %p132 = por %p130, %p131
      %p133 = scmp.le.s32.totalorder 1, %s15
      %p134 = scmp.lt.s32.totalorder %s15, 3
      %p135 = pnand %p133, %p134
      %p136 = pneg %p135
      // Predicated region
      $region9: #{tpu_custom_call.1} parent=5 // pred_check
        _
      $region10: #{tpu_custom_call.1} parent=5 // pred_check_branch
        %138 = sbr.rel (%p135) target = $region12
      $region11: #{tpu_custom_call.1} parent=5 // pred_region
        %s139 = ssub.s32 %s15, 1
        // Predicated region
        $region13: #{tpu_custom_call.1} parent=11 // pred_check
          %p140 = pneg %p76
        $region14: #{tpu_custom_call.1} parent=11 // pred_check_branch
          %142 = sbr.rel (%p140) target = $region16
        $region15: #{tpu_custom_call.1} parent=11 // pred_region
          _
        $region16: #{tpu_custom_call.1} parent=11 // pred_fallthru
          _
        // Predicated region
        $region17: #{tpu_custom_call.1} parent=11 // pred_check
          %p143 = pneg %p97
        $region18: #{tpu_custom_call.1} parent=11 // pred_check_branch
          %145 = sbr.rel (%p143) target = $region20
        $region19: #{tpu_custom_call.1} parent=11 // pred_region
          _
        $region20: #{tpu_custom_call.1} parent=11 // pred_fallthru
          _
      $region12: #{tpu_custom_call.1} parent=5 // pred_fallthru
        _
      %p146 = scmp.lt.s32.totalorder %s15, 2
      // Predicated region
      $region21: #{tpu_custom_call.1} parent=5 // pred_check
        %p147 = pneg %p146
      $region22: #{tpu_custom_call.1} parent=5 // pred_check_branch
        %149 = sbr.rel (%p147) target = $region24
      $region23: #{tpu_custom_call.1} parent=5 // pred_region
        // Predicated region
        $region25: #{tpu_custom_call.1} parent=23 // pred_check
          %p150 = pneg %p49
        $region26: #{tpu_custom_call.1} parent=23 // pred_check_branch
          %152 = sbr.rel (%p150) target = $region28
        $region27: #{tpu_custom_call.1} parent=23 // pred_region
          %s153 = sand.u32 %s39, 1
          %s154 = scalar_lea.sflag [#allocation3], %s153
          %s155 = sand.u32 %s39, 1
          %s156 = smul.addr %s155, 8
          %s157 = scalar_lea.vmem [#allocation2], %s156
          %s158 = smul.u32 2, %s23
          %s160 = ssub.s32 128, 128
          %161 = vsyncadd %s154, %s160
          %s162 = smul.addr %s22, 2
          %s163 = sadd.s32 %s158, %s162
          %s164 = smul.addr %s163, 64
          %s165 = scalar_lea.hbm %s0, %s164
          %s167 = sshll.u32 %s157, 4
          %s168 = int_to_ptr.vmem [resolvable:$true] %s167
          %170 = dma.hbm_to_vmem [thread:$0]  %s165, 128, %s168, %s154
        $region28: #{tpu_custom_call.1} parent=23 // pred_fallthru
          _
      $region24: #{tpu_custom_call.1} parent=5 // pred_fallthru
        _
      %p171 = scmp.le.s32.totalorder 1, %s15
      %p172 = scmp.lt.s32.totalorder %s15, 3
      %p173 = pnand %p171, %p172
      %p174 = pneg %p173
      // Predicated region
      $region29: #{tpu_custom_call.1} parent=5 // pred_check
        _
      $region30: #{tpu_custom_call.1} parent=5 // pred_check_branch
        %176 = sbr.rel (%p173) target = $region32
      $region31: #{tpu_custom_call.1} parent=5 // pred_region
        %s177 = ssub.s32 %s15, 1
        %s178 = sand.u32 %s42, 1
        %s179 = scalar_lea.sflag [#allocation3], %s178
        %s180 = sand.u32 %s42, 1
        %s181 = smul.addr %s180, 8
        %s182 = scalar_lea.vmem [#allocation2], %s181
        // Predicated region
        $region33: #{tpu_custom_call.1} parent=31 // pred_check
          %p183 = pneg %p55
        $region34: #{tpu_custom_call.1} parent=31 // pred_check_branch
          %185 = sbr.rel (%p183) target = $region36
        $region35: #{tpu_custom_call.1} parent=31 // pred_region
          %186 = dma.done %s179, 128
        $region36: #{tpu_custom_call.1} parent=31 // pred_fallthru
          _
        %s187 = sand.u32 %s42, 1
        %s188 = scalar_lea.sflag [#allocation3], %s187
        %s189 = sand.u32 %s42, 1
        %s190 = smul.addr %s189, 8
        %s191 = scalar_lea.vmem [#allocation2], %s190
        %p192 = pneg %p55
        %p193 = pneg %p52
        %p194 = pneg %p76
        %p195 = pneg %p73
        %p196 = pneg %p97
        %p197 = pneg %p94
        %p198 = pneg %p125
        %p199 = pneg %p122
        %s200 = sand.u32 %s112, 1
        %s201 = scalar_lea.sflag [#allocation4], %s200
        %s202 = sand.u32 %s112, 1
        %s203 = smul.addr %s202, 8
        %s204 = scalar_lea.vmem [#allocation5], %s203
        %s205 = smul.u32 2, %s25
        %s206 = smul.u32 2, %s25
        %v207 = vld [vmem:[%s182] sm:$0xff]
        %v208 = vld [vmem:[%s1] sm:$0xf]
        %210 = vset.pattern.permute.xlu0 0
        %211 = vperm.xlu0 %210, %v208
        %v212 = vpop.permute.xlu0 %211
        %v214 = vunpack.c.l.s4 839922192
        %v215 = vunpack.c.0.s8 %v214
        %v216 = vlaneseq
        %v217 = vshrl.u32 %v216, 7
        %v218 = vsub.s32 %v215, %v217
        %v219 = vrot.slane %v212, %v218
        %v221 = vmul.f32 %v207, %v219
        %v223 = vcombine.high %v221, %v221
        %vm225 = vcmask 1043456
        %v226 = vsel %vm225, %v221, 0.0
        %v227 = vrot.slane %v226, 4
        %v228 = vadd.f32 %v226, %v227
        %v229 = vrot.slane %v228, 2
        %v230 = vadd.f32 %v228, %v229
        %v231 = vrot.slane %v230, 1
        %v232 = vadd.f32 %v230, %v231
        %v233 = vsel %vm225, %v223, 0.0
        %v234 = vrot.slane %v233, 4
        %v235 = vadd.f32 %v233, %v234
        %v236 = vrot.slane %v235, 2
        %v237 = vadd.f32 %v235, %v236
        %v238 = vrot.slane %v237, 1
        %v239 = vadd.f32 %v237, %v238
        %v240 = vld [vmem:[%s2] sm:$0x1]
        %242 = vset.pattern.permute.xlu0 0
        %243 = vperm.xlu0 %242, %v240
        %v244 = vpop.permute.xlu0 %243
        %v246 = vlaneseq
        %v247 = vshrl.u32 %v246, 7
        %v248 = vsub.s32 0, %v247
        %v249 = vrot.slane %v244, %v248
        %v250 = vadd.f32 %v232, %v249
        %v251 = vadd.f32 %v239, %v249
        %v252 = vxor.u32 %v250, 2147483648
        %v253 = vxor.u32 %v251, 2147483648
        %v254 = vmul.f32 %v252, 1.442695
        %v255 = vpow.pop %v254
        %v256 = vmul.f32 %v253, 1.442695
        %v257 = vpow.pop %v256
        %v258 = vadd.f32 %v255, 1.0
        %v259 = vadd.f32 %v257, 1.0
        %v260 = vrcp.pop %v258
        %v261 = vmul.f32 1.0, %v260
        %v262 = vrcp.pop %v259
        %v263 = vmul.f32 1.0, %v262
        %s264 = scalar_lea.vmem %s1, 4
        %v265 = vld [vmem:[%s264] sm:$0xf]
        %267 = vset.pattern.permute.xlu0 0
        %268 = vperm.xlu0 %267, %v265
        %v269 = vpop.permute.xlu0 %268
        %v271 = vunpack.c.l.s4 839922192
        %v272 = vunpack.c.0.s8 %v271
        %v273 = vlaneseq
        %v274 = vshrl.u32 %v273, 7
        %v275 = vsub.s32 %v272, %v274
        %v276 = vrot.slane %v269, %v275
        %v278 = vmul.f32 %v207, %v276
        %v280 = vcombine.high %v278, %v278
        %v282 = vsel %vm225, %v278, 0.0
        %v283 = vrot.slane %v282, 4
        %v284 = vadd.f32 %v282, %v283
        %v285 = vrot.slane %v284, 2
        %v286 = vadd.f32 %v284, %v285
        %v287 = vrot.slane %v286, 1
        %v288 = vadd.f32 %v286, %v287
        %v289 = vsel %vm225, %v280, 0.0
        %v290 = vrot.slane %v289, 4
        %v291 = vadd.f32 %v289, %v290
        %v292 = vrot.slane %v291, 2
        %v293 = vadd.f32 %v291, %v292
        %v294 = vrot.slane %v293, 1
        %v295 = vadd.f32 %v293, %v294
        %s296 = scalar_lea.vmem %s2, 1
        %v297 = vld [vmem:[%s296] sm:$0x1]
        %299 = vset.pattern.permute.xlu0 0
        %300 = vperm.xlu0 %299, %v297
        %v301 = vpop.permute.xlu0 %300
        %v303 = vlaneseq
        %v304 = vshrl.u32 %v303, 7
        %v305 = vsub.s32 0, %v304
        %v306 = vrot.slane %v301, %v305
        %v307 = vadd.f32 %v288, %v306
        %v308 = vadd.f32 %v295, %v306
        %v309 = vxor.u32 %v307, 2147483648
        %v310 = vxor.u32 %v308, 2147483648
        %v311 = vmul.f32 %v309, 1.442695
        %v312 = vpow.pop %v311
        %v313 = vmul.f32 %v310, 1.442695
        %v314 = vpow.pop %v313
        %v315 = vadd.f32 %v312, 1.0
        %v316 = vadd.f32 %v314, 1.0
        %v317 = vrcp.pop %v315
        %v318 = vmul.f32 1.0, %v317
        %v319 = vrcp.pop %v316
        %v320 = vmul.f32 1.0, %v319
        %v321 = vadd.f32 %v261, %v318
        %v322 = vadd.f32 %v263, %v320
        %v325 = vcombine.low %v321, %v322
        %v327 = vmul.f32 %v207, %v325
        %328 = vst [vmem:[%s204] sm:$0xff] %v327
        %s329 = sand.u32 %s112, 1
        %s330 = scalar_lea.sflag [#allocation4], %s329
        %s331 = sand.u32 %s112, 1
        %s332 = smul.addr %s331, 8
        %s333 = scalar_lea.vmem [#allocation5], %s332
        // Predicated region
        $region37: #{tpu_custom_call.1} parent=31 // pred_check
          %p334 = pneg %p122
        $region38: #{tpu_custom_call.1} parent=31 // pred_check_branch
          %336 = sbr.rel (%p334) target = $region40
        $region39: #{tpu_custom_call.1} parent=31 // pred_region
          %s337 = smul.u32 2, %s25
          %s339 = ssub.s32 128, 128
          %340 = vsyncadd %s330, %s339
          %s341 = smul.addr %s24, 2
          %s342 = sadd.s32 %s337, %s341
          %s343 = smul.addr %s342, 64
          %s344 = scalar_lea.hbm %s3, %s343
          %s346 = sshll.u32 %s333, 4
          %s347 = int_to_ptr.vmem [resolvable:$true] %s346
          %349 = dma.vmem_to_hbm [thread:$0]  %s347, 128, %s344, %s330
        $region40: #{tpu_custom_call.1} parent=31 // pred_fallthru
          _
      $region32: #{tpu_custom_call.1} parent=5 // pred_fallthru
        _
      %p350 = scmp.le.s32.totalorder 2, %s15
      // Predicated region
      $region41: #{tpu_custom_call.1} parent=5 // pred_check
        %p351 = pneg %p350
      $region42: #{tpu_custom_call.1} parent=5 // pred_check_branch
        %353 = sbr.rel (%p351) target = $region44
      $region43: #{tpu_custom_call.1} parent=5 // pred_region
        %s354 = ssub.s32 %s15, 2
        // Predicated region
        $region45: #{tpu_custom_call.1} parent=43 // pred_check
          %p355 = pneg %p128
        $region46: #{tpu_custom_call.1} parent=43 // pred_check_branch
          %357 = sbr.rel (%p355) target = $region48
        $region47: #{tpu_custom_call.1} parent=43 // pred_region
          %s358 = sand.u32 %s113, 1
          %s359 = scalar_lea.sflag [#allocation4], %s358
          %s360 = sand.u32 %s113, 1
          %s361 = smul.addr %s360, 8
          %s362 = scalar_lea.vmem [#allocation5], %s361
          %363 = dma.done %s359, 128
        $region48: #{tpu_custom_call.1} parent=43 // pred_fallthru
          _
      $region44: #{tpu_custom_call.1} parent=5 // pred_fallthru
        _
    $region6: #{tpu_custom_call.1} parent=1 // loop_footer
      %s19 = sadd.s32 1, %s15
    $region7: #{tpu_custom_call.1} parent=1 // loop_footer_branch
      %14 = sbr.rel target = $region3
    $region8: #{tpu_custom_call.1} parent=1 // loop_exit
      _
    %364 = vsyncpa [#allocation3], 1
    %s365 = scalar_lea.sflag [#allocation3], 1
    %366 = vsyncpa %s365, 1
    %367 = vsyncpa [#allocation4], 1
    %s368 = scalar_lea.sflag [#allocation4], 1
    %369 = vsyncpa %s368, 1

</llo_original>
